<compile_context>
chip_gen: v5e
topology: v5e:2x2
jax: 0.10.0
libtpu: 0.0.40
codegen_flags: <defaults>
</compile_context>

<pallas_src>
import math
from functools import partial

import jax
import jax.numpy as jnp
from jax.experimental import pallas as pl
from jax.experimental.pallas import tpu as pltpu


def _upsample_shuffle_kernel(x_ref, w_ref, b_ref, m_ref, o_ref, *, h, w, k_taps, scale):
    """One block of B batch elements per grid step.

    x_ref : (B, Cin, H*W)          f32   NCHW slab, spatial flattened onto lanes
    w_ref : (scale*Cout, K*Cin)    bf16  conv weights, rows ordered (s, oc), cols (k, ci)
    b_ref : (scale*Cout, 1)        f32   bias, rows ordered (s, oc)
    m_ref : (K, B*H*W)             f32   per-tap 0/1 validity mask (kills row/batch/wrap taps)
    o_ref : (B, Cout, h*scale*w)   f32   final pixel-shuffled output (lane-dense)
    """
    bsz, c_in, s_len = x_ref.shape
    out_ch = o_ref.shape[1]
    pad = (k_taps - 1) // 2
    n_lanes = bsz * s_len

    # --- stage 1: lane-concatenate the batch into (Cin, B*S); S-aligned, cheap retile.
    x3 = x_ref[...]                                              # (B, Cin, S) f32
    x2 = jnp.concatenate([x3[b] for b in range(bsz)], axis=1)    # (Cin, B*S) f32

    # --- stage 2: im2col via XLU lane rolls + f32 boundary mask, one bf16 cast per tap.
    m_all = m_ref[...]                                           # (K, B*S) f32, 0/1
    cols = []
    for k in range(k_taps):
        d = k - pad
        # tap[ci, p] == x2[ci, p + d] (rotated); mask zeroes every position where
        # p + d crosses an h-row boundary, which also covers batch/global wrap lanes.
        tap = x2 if d == 0 else pltpu.roll(x2, shift=(-d) % n_lanes, axis=1)
        tap = tap * m_all[k:k + 1, :]                            # f32 mask (v5e-friendly)
        cols.append(tap.astype(jnp.bfloat16))
    x_im = jnp.concatenate(cols, axis=0)                         # (K*Cin, B*S) bf16

    # --- stage 3: single MXU contraction over K*Cin (bf16 in, f32 accumulate) + bias.
    y = jnp.dot(w_ref[...], x_im, preferred_element_type=jnp.float32)
    y = y + b_ref[...]                                           # (scale*Cout, B*S) f32

    # --- stage 4: fused pixel shuffle assembled in-register, ONE lane-dense store.
    # out[b, oc, hh*scale*w + s*w + ww] = y[s*Cout + oc, b*S + hh*w + ww]
    outs = []
    for b in range(bsz):
        yb = y[:, b * s_len:(b + 1) * s_len]                     # (scale*Cout, S), S-aligned slice
        pieces = []
        for hh in range(h):
            for s in range(scale):
                pieces.append(yb[s * out_ch:(s + 1) * out_ch, hh * w:(hh + 1) * w])
        outs.append(jnp.concatenate(pieces, axis=1))             # (Cout, h*scale*w)
    o_ref[...] = jnp.stack(outs, axis=0).astype(o_ref.dtype)     # single full-block store


def _pick_batch_block(n, s_len, target_lanes=1024):
    """Largest divisor of n giving ~target_lanes matmul width, keeping >=2 grid blocks
    when possible (v7x has 2 TensorCores; v5e/v6e are unaffected)."""
    b_cap = max(1, target_lanes // max(s_len, 1))
    divisors = [d for d in range(1, n + 1) if n % d == 0]
    cands = [d for d in divisors if d <= b_cap and n // d >= 2]
    if not cands:
        cands = [d for d in divisors if d <= b_cap] or [1]
    return max(cands)


@partial(jax.jit, static_argnums=(3, 4))
def pixel_shuffle_pack_1d(x_nchw, weight_oihw, bias, out_channels, scale_factor):
    """x_nchw: (n, c_in, h, w); weight_oihw: (out_ch*scale, c_in, 1, K); bias: (out_ch*scale,)."""
    n, c_in, h, w = x_nchw.shape
    c_total, c_in_w, _, K = weight_oihw.shape
    assert c_total == out_channels * scale_factor and c_in_w == c_in
    # TODO(synk): an even upsample_kernel (conv output width != w) would need an un-fused path.
    assert K % 2 == 1, "fused kernel assumes a 'same' conv (odd upsample_kernel)"
    pad = (K - 1) // 2
    S = h * w
    L = h * scale_factor * w

    B = _pick_batch_block(n, S)
    n_lanes = B * S

    # --- tiny parameter repacks (O(K*Cin*Cout) work, negligible) ---
    # Weight matrix indexed [(s, oc), (k, ci)]: rows reordered so each sub-pixel slab is a
    # contiguous sublane slice inside the kernel; bf16 operands for the MXU.
    w_mat = jnp.transpose(weight_oihw[:, :, 0, :], (0, 2, 1)).reshape(c_total, K * c_in)
    w_mat = w_mat.reshape(out_channels, scale_factor, K * c_in)
    w_mat = jnp.transpose(w_mat, (1, 0, 2)).reshape(c_total, K * c_in).astype(jnp.bfloat16)
    b_col = jnp.transpose(bias.reshape(out_channels, scale_factor), (1, 0)).reshape(c_total, 1)

    # Per-tap validity mask on the (b, hh, ww)-flattened lane axis: tap with offset d = k - pad
    # is valid at lane j iff 0 <= (j % w) + d < w (keeps the conv inside each h-row; batch and
    # roll-wrap boundaries coincide with row boundaries, so they are masked too).  Kept as a
    # tiny resident f32 input so no integer modulo is needed inside the kernel.
    pos = jnp.arange(n_lanes, dtype=jnp.int32) % w
    offs = jnp.arange(K, dtype=jnp.int32)[:, None] - pad
    mask = ((pos[None, :] + offs >= 0) & (pos[None, :] + offs < w)).astype(jnp.float32)

    # Lane-dense input view: (n, Cin, H*W) - contiguous reshape, no HBM transpose pass.
    x_flat = x_nchw.reshape(n, c_in, S)

    kernel = partial(_upsample_shuffle_kernel, h=h, w=w, k_taps=K, scale=scale_factor)
    out_flat = pl.pallas_call(
        kernel,
        out_shape=jax.ShapeDtypeStruct((n, out_channels, L), jnp.float32),
        grid=(n // B,),
        in_specs=[
            pl.BlockSpec((B, c_in, S), lambda i: (i, 0, 0)),
            pl.BlockSpec((c_total, K * c_in), lambda i: (0, 0)),   # resident weights
            pl.BlockSpec((c_total, 1), lambda i: (0, 0)),          # resident bias
            pl.BlockSpec((K, n_lanes), lambda i: (0, 0)),          # resident tap masks
        ],
        out_specs=pl.BlockSpec((B, out_channels, L), lambda i: (i, 0, 0)),
        compiler_params=pltpu.CompilerParams(dimension_semantics=("parallel",)),
    )(x_flat, w_mat, b_col, mask)

    # Free contiguous reshape back to the module's 4-D output layout.
    return out_flat.reshape(n, out_channels, h, scale_factor * w)


def _kaiming_conv_init(key, out_ch_total, in_ch, K):
    # kaiming_uniform_(a=0, mode='fan_in'): bound = sqrt(2) * sqrt(3 / fan_in)
    fan_in = in_ch * 1 * K
    k_w, k_b = jax.random.split(key)
    w_bound = math.sqrt(2.0) * math.sqrt(3.0 / fan_in)
    weight = jax.random.uniform(
        k_w, (out_ch_total, in_ch, 1, K), jnp.float32, -w_bound, w_bound
    )
    # PyTorch Conv2d default bias init: U(-1/sqrt(fan_in), 1/sqrt(fan_in))
    b_bound = 1.0 / math.sqrt(fan_in)
    bias = jax.random.uniform(k_b, (out_ch_total,), jnp.float32, -b_bound, b_bound)
    return weight, bias


def _reference(x_nchw, weight_oihw, bias, out_channels, scale_factor):
    K = weight_oihw.shape[-1]
    pad = (K - 1) // 2
    y = jax.lax.conv_general_dilated(
        x_nchw, weight_oihw,
        window_strides=(1, 1),
        padding=[(0, 0), (pad, pad)],
        dimension_numbers=("NCHW", "OIHW", "NCHW"),
    ) + bias.reshape(1, -1, 1, 1)
    n, c, h, w = y.shape
    y = y.reshape(n, out_channels, scale_factor, h, w)
    y = jnp.transpose(y, (0, 1, 3, 2, 4))
    return y.reshape(n, out_channels, h, scale_factor * w)


if __name__ == "__main__":
    key = jax.random.PRNGKey(0)
    k_x, k_p = jax.random.split(key)

    # small shapes consistent with the module's forward; n=4 exercises the batched grid
    n, in_channels, h, w = 4, 8, 4, 32
    out_channels, scale_factor, upsample_kernel = 8, 2, 3
    c_total = out_channels * scale_factor

    x = jax.random.normal(k_x, (n, in_channels, h, w), jnp.float32)
    weight, bias = _kaiming_conv_init(k_p, c_total, in_channels, upsample_kernel)

    out = pixel_shuffle_pack_1d(x, weight, bias, out_channels, scale_factor)
    out = jax.block_until_ready(out)

    ref = _reference(x, weight, bias, out_channels, scale_factor)
    assert out.shape == (n, out_channels, h, scale_factor * w), out.shape
    # bf16 matmul operands (f32 accumulation) -> relaxed tolerance vs f32 reference.
    max_err = float(jnp.max(jnp.abs(out - ref)))
    assert jnp.allclose(out, ref, atol=5e-2, rtol=5e-2), max_err

    print("KERNEL_OK")
</pallas_src>

<mosaic_0001>
module attributes {stable_mosaic.version = 11 : i64} {
  func.func @_upsample_shuffle_kernel(%arg0: i32, %arg1: memref<2x8x128xf32, #tpu.memory_space<vmem>>, %arg2: memref<16x24xbf16, #tpu.memory_space<vmem>>, %arg3: memref<16x1xf32, #tpu.memory_space<vmem>>, %arg4: memref<3x256xf32, #tpu.memory_space<vmem>>, %arg5: memref<2x8x256xf32, #tpu.memory_space<vmem>>) attributes {dimension_semantics = [#tpu.dimension_semantics<parallel>], iteration_bounds = array<i64: 2>, scalar_prefetch = 0 : i64, scratch_operands = 0 : i64, tpu.core_type = #tpu.core_type<tc>, window_params = [{transform_indices = @transform_0, window_bounds = array<i64: 2, 8, 128>}, {pipeline_mode = #tpu.pipeline_mode<synchronous>, transform_indices = @transform_1, window_bounds = array<i64: 16, 24>}, {pipeline_mode = #tpu.pipeline_mode<synchronous>, transform_indices = @transform_2, window_bounds = array<i64: 16, 1>}, {pipeline_mode = #tpu.pipeline_mode<synchronous>, transform_indices = @transform_3, window_bounds = array<i64: 3, 256>}, {transform_indices = @transform_4, window_bounds = array<i64: 2, 8, 256>}]} {
    %c0 = arith.constant 0 : index
    %c0_0 = arith.constant 0 : index
    %c0_1 = arith.constant 0 : index
    %0 = vector.load %arg1[%c0, %c0_0, %c0_1] : memref<2x8x128xf32, #tpu.memory_space<vmem>>, vector<2x8x128xf32>
    %1 = vector.extract_strided_slice %0 {offsets = [0, 0, 0], sizes = [1, 8, 128], strides = [1, 1, 1]} : vector<2x8x128xf32> to vector<1x8x128xf32>
    %2 = vector.shape_cast %1 : vector<1x8x128xf32> to vector<8x128xf32>
    %3 = vector.extract_strided_slice %0 {offsets = [1, 0, 0], sizes = [1, 8, 128], strides = [1, 1, 1]} : vector<2x8x128xf32> to vector<1x8x128xf32>
    %4 = vector.shape_cast %3 : vector<1x8x128xf32> to vector<8x128xf32>
    %5 = tpu.concatenate %2, %4 in 1 : vector<8x128xf32>, vector<8x128xf32> -> vector<8x256xf32>
    %c0_2 = arith.constant 0 : index
    %c0_3 = arith.constant 0 : index
    %6 = vector.load %arg4[%c0_2, %c0_3] : memref<3x256xf32, #tpu.memory_space<vmem>>, vector<3x256xf32>
    %c1_i32 = arith.constant 1 : i32
    %7 = tpu.dynamic_rotate %5 by %c1_i32 dim 1 : vector<8x256xf32>, i32 -> vector<8x256xf32>
    %8 = vector.extract_strided_slice %6 {offsets = [0, 0], sizes = [1, 256], strides = [1, 1]} : vector<3x256xf32> to vector<1x256xf32>
    %9 = vector.broadcast %8 : vector<1x256xf32> to vector<8x256xf32>
    %10 = arith.mulf %7, %9 : vector<8x256xf32>
    %11 = arith.truncf %10 : vector<8x256xf32> to vector<8x256xbf16>
    %12 = vector.extract_strided_slice %6 {offsets = [1, 0], sizes = [1, 256], strides = [1, 1]} : vector<3x256xf32> to vector<1x256xf32>
    %13 = vector.broadcast %12 : vector<1x256xf32> to vector<8x256xf32>
    %14 = arith.mulf %5, %13 : vector<8x256xf32>
    %15 = arith.truncf %14 : vector<8x256xf32> to vector<8x256xbf16>
    %c255_i32 = arith.constant 255 : i32
    %16 = tpu.dynamic_rotate %5 by %c255_i32 dim 1 : vector<8x256xf32>, i32 -> vector<8x256xf32>
    %17 = vector.extract_strided_slice %6 {offsets = [2, 0], sizes = [1, 256], strides = [1, 1]} : vector<3x256xf32> to vector<1x256xf32>
    %18 = vector.broadcast %17 : vector<1x256xf32> to vector<8x256xf32>
    %19 = arith.mulf %16, %18 : vector<8x256xf32>
    %20 = arith.truncf %19 : vector<8x256xf32> to vector<8x256xbf16>
    %21 = tpu.concatenate %11, %15, %20 in 0 : vector<8x256xbf16>, vector<8x256xbf16>, vector<8x256xbf16> -> vector<24x256xbf16>
    %c0_4 = arith.constant 0 : index
    %c0_5 = arith.constant 0 : index
    %22 = vector.load %arg2[%c0_4, %c0_5] : memref<16x24xbf16, #tpu.memory_space<vmem>>, vector<16x24xbf16>
    %cst = arith.constant dense<0.000000e+00> : vector<16x256xf32>
    %23 = tpu.matmul %22, %21, %cst {dimension_numbers = #tpu.dot_dimension_numbers<[1], [0], [0], [1], [0, 0, 1, 1], [], []>} : vector<16x24xbf16>, vector<24x256xbf16>, vector<16x256xf32> -> vector<16x256xf32>
    %c0_6 = arith.constant 0 : index
    %c0_7 = arith.constant 0 : index
    %24 = vector.load %arg3[%c0_6, %c0_7] : memref<16x1xf32, #tpu.memory_space<vmem>>, vector<16x1xf32>
    %25 = vector.broadcast %24 : vector<16x1xf32> to vector<16x256xf32>
    %26 = arith.addf %23, %25 : vector<16x256xf32>
    %27 = vector.extract_strided_slice %26 {offsets = [0, 0], sizes = [16, 128], strides = [1, 1]} : vector<16x256xf32> to vector<16x128xf32>
    %28 = vector.extract_strided_slice %27 {offsets = [0, 0], sizes = [8, 32], strides = [1, 1]} : vector<16x128xf32> to vector<8x32xf32>
    %29 = vector.extract_strided_slice %27 {offsets = [8, 0], sizes = [8, 32], strides = [1, 1]} : vector<16x128xf32> to vector<8x32xf32>
    %30 = vector.extract_strided_slice %27 {offsets = [0, 32], sizes = [8, 32], strides = [1, 1]} : vector<16x128xf32> to vector<8x32xf32>
    %31 = vector.extract_strided_slice %27 {offsets = [8, 32], sizes = [8, 32], strides = [1, 1]} : vector<16x128xf32> to vector<8x32xf32>
    %32 = vector.extract_strided_slice %27 {offsets = [0, 64], sizes = [8, 32], strides = [1, 1]} : vector<16x128xf32> to vector<8x32xf32>
    %33 = vector.extract_strided_slice %27 {offsets = [8, 64], sizes = [8, 32], strides = [1, 1]} : vector<16x128xf32> to vector<8x32xf32>
    %34 = vector.extract_strided_slice %27 {offsets = [0, 96], sizes = [8, 32], strides = [1, 1]} : vector<16x128xf32> to vector<8x32xf32>
    %35 = vector.extract_strided_slice %27 {offsets = [8, 96], sizes = [8, 32], strides = [1, 1]} : vector<16x128xf32> to vector<8x32xf32>
    %36 = tpu.concatenate %28, %29, %30, %31, %32, %33, %34, %35 in 1 : vector<8x32xf32>, vector<8x32xf32>, vector<8x32xf32>, vector<8x32xf32>, vector<8x32xf32>, vector<8x32xf32>, vector<8x32xf32>, vector<8x32xf32> -> vector<8x256xf32>
    %37 = vector.extract_strided_slice %26 {offsets = [0, 128], sizes = [16, 128], strides = [1, 1]} : vector<16x256xf32> to vector<16x128xf32>
    %38 = vector.extract_strided_slice %37 {offsets = [0, 0], sizes = [8, 32], strides = [1, 1]} : vector<16x128xf32> to vector<8x32xf32>
    %39 = vector.extract_strided_slice %37 {offsets = [8, 0], sizes = [8, 32], strides = [1, 1]} : vector<16x128xf32> to vector<8x32xf32>
    %40 = vector.extract_strided_slice %37 {offsets = [0, 32], sizes = [8, 32], strides = [1, 1]} : vector<16x128xf32> to vector<8x32xf32>
    %41 = vector.extract_strided_slice %37 {offsets = [8, 32], sizes = [8, 32], strides = [1, 1]} : vector<16x128xf32> to vector<8x32xf32>
    %42 = vector.extract_strided_slice %37 {offsets = [0, 64], sizes = [8, 32], strides = [1, 1]} : vector<16x128xf32> to vector<8x32xf32>
    %43 = vector.extract_strided_slice %37 {offsets = [8, 64], sizes = [8, 32], strides = [1, 1]} : vector<16x128xf32> to vector<8x32xf32>
    %44 = vector.extract_strided_slice %37 {offsets = [0, 96], sizes = [8, 32], strides = [1, 1]} : vector<16x128xf32> to vector<8x32xf32>
    %45 = vector.extract_strided_slice %37 {offsets = [8, 96], sizes = [8, 32], strides = [1, 1]} : vector<16x128xf32> to vector<8x32xf32>
    %46 = tpu.concatenate %38, %39, %40, %41, %42, %43, %44, %45 in 1 : vector<8x32xf32>, vector<8x32xf32>, vector<8x32xf32>, vector<8x32xf32>, vector<8x32xf32>, vector<8x32xf32>, vector<8x32xf32>, vector<8x32xf32> -> vector<8x256xf32>
    %47 = vector.shape_cast %36 : vector<8x256xf32> to vector<1x8x256xf32>
    %48 = vector.shape_cast %46 : vector<8x256xf32> to vector<1x8x256xf32>
    %49 = tpu.concatenate %47, %48 in 0 : vector<1x8x256xf32>, vector<1x8x256xf32> -> vector<2x8x256xf32>
    %c0_8 = arith.constant 0 : index
    %c0_9 = arith.constant 0 : index
    %c0_10 = arith.constant 0 : index
    %50 = vector.load %arg5[%c0_8, %c0_9, %c0_10] : memref<2x8x256xf32, #tpu.memory_space<vmem>>, vector<2x8x256xf32>
    tpu.vector_store %arg5[%c0_8, %c0_9, %c0_10], %49 {strides = array<i32>} : memref<2x8x256xf32, #tpu.memory_space<vmem>>, vector<2x8x256xf32>,
    return
  }
  func.func @transform_0(%arg0: i32) -> (i32, i32, i32) {
    %c0_i32 = arith.constant 0 : i32
    %c0_i32_0 = arith.constant 0 : i32
    %c0_i32_1 = arith.constant 0 : i32
    return %arg0, %c0_i32, %c0_i32_0 : i32, i32, i32
  }
  func.func @transform_1(%arg0: i32) -> (i32, i32) {
    %c0_i32 = arith.constant 0 : i32
    %c0_i32_0 = arith.constant 0 : i32
    %c0_i32_1 = arith.constant 0 : i32
    return %c0_i32, %c0_i32_0 : i32, i32
  }
  func.func @transform_2(%arg0: i32) -> (i32, i32) {
    %c0_i32 = arith.constant 0 : i32
    %c0_i32_0 = arith.constant 0 : i32
    %c0_i32_1 = arith.constant 0 : i32
    return %c0_i32, %c0_i32_0 : i32, i32
  }
  func.func @transform_3(%arg0: i32) -> (i32, i32) {
    %c0_i32 = arith.constant 0 : i32
    %c0_i32_0 = arith.constant 0 : i32
    %c0_i32_1 = arith.constant 0 : i32
    return %c0_i32, %c0_i32_0 : i32, i32
  }
  func.func @transform_4(%arg0: i32) -> (i32, i32, i32) {
    %c0_i32 = arith.constant 0 : i32
    %c0_i32_0 = arith.constant 0 : i32
    %c0_i32_1 = arith.constant 0 : i32
    return %arg0, %c0_i32, %c0_i32_0 : i32, i32, i32
  }
}

</mosaic_0001>

<llo_original>
// kernel: pixel_shuffle_pack_1d.1
$region0: #{pixel_shuffle_pack_1d.1}
  #allocation0 [shape = 'u32[]', space=smem, size = 0x4, offset = 0x4, fixed_abs, tag = 'smem constant byte address 0x4 - core index']
  #allocation1 [shape = 'u32[72,128]{1,0:T(1,128)}', space=vmem, size = 0x9000, scoped, tag = 'internal scratch']
  %s0 = inlined_call_operand.vmem [shape: f32[4,8,128], index: 0, kind: input, shape index: {}]
  %s1 = inlined_call_operand.vmem [shape: bf16[16,24], index: 1, kind: input, shape index: {}]
  %s2 = inlined_call_operand.vmem [shape: f32[16,1], index: 2, kind: input, shape index: {}]
  %s3 = inlined_call_operand.vmem [shape: f32[3,256], index: 3, kind: input, shape index: {}]
  %s4 = inlined_call_operand.vmem [shape: f32[4,8,256], index: 4, kind: output, shape index: {}]
  %s5 = sld [smem:[#allocation0]]
  $region49: #{pixel_shuffle_pack_1d.1} parent=0
    _
  %s7 = ssub.s32 1, %s5
  %s8 = scalar_select 0, %s7, %s5
  loop: start=0, step=1, limit=4
  $region2: #{pixel_shuffle_pack_1d.1} parent=0 // loop_pre_header
    _
  $region3: #{pixel_shuffle_pack_1d.1} parent=0 // loop_header
    %s10 = sphi 0, %s14
    %p11 = scmp.ge.s32.totalorder %s10, 4
    %s20 = sphi 0, %s22
    %s23 = sphi 0, %s20
    %s24 = sphi 0, %s23
    %s40 = sphi 0, %s24
    %s44 = sphi 0, %s44
    %s46 = sphi 0, %s44
    %s47 = sphi 0, %s46
    %s61 = sphi 0, %s47
    %s65 = sphi 0, %s65
    %s67 = sphi 0, %s65
    %s68 = sphi 0, %s67
    %s82 = sphi 0, %s68
    %s86 = sphi 0, %s86
    %s88 = sphi 0, %s86
    %s89 = sphi 0, %s88
    %s103 = sphi 0, %s89
    %s109 = sphi 0, %s111
    %s112 = sphi 0, %s109
    %s113 = sphi 0, %s112
    %s129 = sphi 0, %s113
  $region4: #{pixel_shuffle_pack_1d.1} parent=0 // loop_header_branch
    %13 = sbr.rel (%p11) target = $region8
  $region5: #{pixel_shuffle_pack_1d.1} parent=0 // loop_body
    %s15 = ssub.s32 %s10, 1
    %s16 = ssub.s32 %s10, 2
    %s17 = sadd.s32 %s10, 1
    %s18 = ssub.s32 %s10, %s17
    %p19 = scmp.eq.s32.totalorder %s18, 0
    %s21 = sadd.s32 %s20, 1
    %s22 = scalar_select %p19, %s20, %s21
    %p25 = pneg %p19
    %p26 = scmp.eq.s32.totalorder %s10, 1
    %p27 = por %p25, %p26
    %p28 = scmp.ne.s32.totalorder %s20, %s23
    %p29 = scmp.eq.s32.totalorder %s10, 0
    %p30 = por %p28, %p29
    %p31 = scmp.ne.s32.totalorder %s20, %s23
    %p32 = scmp.eq.s32.totalorder %s15, 1
    %p33 = por %p31, %p32
    %p34 = scmp.ne.s32.totalorder %s23, %s24
    %p35 = scmp.eq.s32.totalorder %s15, 0
    %p36 = por %p34, %p35
    %p37 = scmp.ne.s32.totalorder %s23, %s24
    %p38 = scmp.eq.s32.totalorder %s16, 1
    %p39 = por %p37, %p38
    %p41 = scmp.ne.s32.totalorder %s24, %s40
    %p42 = scmp.eq.s32.totalorder %s16, 0
    %p43 = por %p41, %p42
    %s45 = sadd.s32 %s44, 1
    %p48 = scmp.eq.s32.totalorder %s10, 1
    %p49 = scmp.ne.s32.totalorder %s44, %s46
    %p50 = scmp.eq.s32.totalorder %s10, 0
    %p51 = por %p49, %p50
    %p52 = scmp.ne.s32.totalorder %s44, %s46
    %p53 = scmp.eq.s32.totalorder %s15, 1
    %p54 = por %p52, %p53
    %p55 = scmp.ne.s32.totalorder %s46, %s47
    %p56 = scmp.eq.s32.totalorder %s15, 0
    %p57 = por %p55, %p56
    %p58 = scmp.ne.s32.totalorder %s46, %s47
    %p59 = scmp.eq.s32.totalorder %s16, 1
    %p60 = por %p58, %p59
    %p62 = scmp.ne.s32.totalorder %s47, %s61
    %p63 = scmp.eq.s32.totalorder %s16, 0
    %p64 = por %p62, %p63
    %s66 = sadd.s32 %s65, 1
    %p69 = scmp.eq.s32.totalorder %s10, 1
    %p70 = scmp.ne.s32.totalorder %s65, %s67
    %p71 = scmp.eq.s32.totalorder %s10, 0
    %p72 = por %p70, %p71
    %p73 = scmp.ne.s32.totalorder %s65, %s67
    %p74 = scmp.eq.s32.totalorder %s15, 1
    %p75 = por %p73, %p74
    %p76 = scmp.ne.s32.totalorder %s67, %s68
    %p77 = scmp.eq.s32.totalorder %s15, 0
    %p78 = por %p76, %p77
    %p79 = scmp.ne.s32.totalorder %s67, %s68
    %p80 = scmp.eq.s32.totalorder %s16, 1
    %p81 = por %p79, %p80
    %p83 = scmp.ne.s32.totalorder %s68, %s82
    %p84 = scmp.eq.s32.totalorder %s16, 0
    %p85 = por %p83, %p84
    %s87 = sadd.s32 %s86, 1
    %p90 = scmp.eq.s32.totalorder %s10, 1
    %p91 = scmp.ne.s32.totalorder %s86, %s88
    %p92 = scmp.eq.s32.totalorder %s10, 0
    %p93 = por %p91, %p92
    %p94 = scmp.ne.s32.totalorder %s86, %s88
    %p95 = scmp.eq.s32.totalorder %s15, 1
    %p96 = por %p94, %p95
    %p97 = scmp.ne.s32.totalorder %s88, %s89
    %p98 = scmp.eq.s32.totalorder %s15, 0
    %p99 = por %p97, %p98
    %p100 = scmp.ne.s32.totalorder %s88, %s89
    %p101 = scmp.eq.s32.totalorder %s16, 1
    %p102 = por %p100, %p101
    %p104 = scmp.ne.s32.totalorder %s89, %s103
    %p105 = scmp.eq.s32.totalorder %s16, 0
    %p106 = por %p104, %p105
    %s107 = ssub.s32 %s10, %s17
    %p108 = scmp.eq.s32.totalorder %s107, 0
    %s110 = sadd.s32 %s109, 1
    %s111 = scalar_select %p108, %s109, %s110
    %p114 = pneg %p108
    %p115 = scmp.eq.s32.totalorder %s10, 1
    %p116 = por %p114, %p115
    %p117 = scmp.ne.s32.totalorder %s109, %s112
    %p118 = scmp.eq.s32.totalorder %s10, 0
    %p119 = por %p117, %p118
    %p120 = scmp.ne.s32.totalorder %s109, %s112
    %p121 = scmp.eq.s32.totalorder %s15, 1
    %p122 = por %p120, %p121
    %p123 = scmp.ne.s32.totalorder %s112, %s113
    %p124 = scmp.eq.s32.totalorder %s15, 0
    %p125 = por %p123, %p124
    %p126 = scmp.ne.s32.totalorder %s112, %s113
    %p127 = scmp.eq.s32.totalorder %s16, 1
    %p128 = por %p126, %p127
    %p130 = scmp.ne.s32.totalorder %s113, %s129
    %p131 = scmp.eq.s32.totalorder %s16, 0
    %p132 = por %p130, %p131
    %p133 = scmp.le.s32.totalorder 1, %s10
    %p134 = scmp.lt.s32.totalorder %s10, 3
    %p135 = pnand %p133, %p134
    %p136 = pneg %p135
    // Predicated region
    $region9: #{pixel_shuffle_pack_1d.1} parent=5 // pred_check
      _
    $region10: #{pixel_shuffle_pack_1d.1} parent=5 // pred_check_branch
      %138 = sbr.rel (%p135) target = $region12
    $region11: #{pixel_shuffle_pack_1d.1} parent=5 // pred_region
      %s139 = ssub.s32 %s10, 1
      // Predicated region
      $region13: #{pixel_shuffle_pack_1d.1} parent=11 // pred_check
        %p140 = pneg %p57
      $region14: #{pixel_shuffle_pack_1d.1} parent=11 // pred_check_branch
        %142 = sbr.rel (%p140) target = $region16
      $region15: #{pixel_shuffle_pack_1d.1} parent=11 // pred_region
        _
      $region16: #{pixel_shuffle_pack_1d.1} parent=11 // pred_fallthru
        _
      // Predicated region
      $region17: #{pixel_shuffle_pack_1d.1} parent=11 // pred_check
        %p143 = pneg %p78
      $region18: #{pixel_shuffle_pack_1d.1} parent=11 // pred_check_branch
        %145 = sbr.rel (%p143) target = $region20
      $region19: #{pixel_shuffle_pack_1d.1} parent=11 // pred_region
        _
      $region20: #{pixel_shuffle_pack_1d.1} parent=11 // pred_fallthru
        _
      // Predicated region
      $region21: #{pixel_shuffle_pack_1d.1} parent=11 // pred_check
        %p146 = pneg %p99
      $region22: #{pixel_shuffle_pack_1d.1} parent=11 // pred_check_branch
        %148 = sbr.rel (%p146) target = $region24
      $region23: #{pixel_shuffle_pack_1d.1} parent=11 // pred_region
        _
      $region24: #{pixel_shuffle_pack_1d.1} parent=11 // pred_fallthru
        _
    $region12: #{pixel_shuffle_pack_1d.1} parent=5 // pred_fallthru
      _
    %p149 = scmp.lt.s32.totalorder %s10, 2
    // Predicated region
    $region25: #{pixel_shuffle_pack_1d.1} parent=5 // pred_check
      %p150 = pneg %p149
    $region26: #{pixel_shuffle_pack_1d.1} parent=5 // pred_check_branch
      %152 = sbr.rel (%p150) target = $region28
    $region27: #{pixel_shuffle_pack_1d.1} parent=5 // pred_region
      // Predicated region
      $region29: #{pixel_shuffle_pack_1d.1} parent=27 // pred_check
        %p153 = pneg %p30
      $region30: #{pixel_shuffle_pack_1d.1} parent=27 // pred_check_branch
        %155 = sbr.rel (%p153) target = $region32
      $region31: #{pixel_shuffle_pack_1d.1} parent=27 // pred_region
        %s156 = smul.u32 2, %s10
        %p157 = scmp.lt.s32.totalorder %s156, 3
        %s158 = scalar_select %p157, %s156, 3
        %s159 = smul.addr %s158, 8
        %s160 = scalar_lea.vmem %s0, %s159
        %s161 = smul.u32 2, %s10
      $region32: #{pixel_shuffle_pack_1d.1} parent=27 // pred_fallthru
        _
    $region28: #{pixel_shuffle_pack_1d.1} parent=5 // pred_fallthru
      _
    %p162 = scmp.le.s32.totalorder 1, %s10
    %p163 = scmp.lt.s32.totalorder %s10, 3
    %p164 = pnand %p162, %p163
    %p165 = pneg %p164
    // Predicated region
    $region33: #{pixel_shuffle_pack_1d.1} parent=5 // pred_check
      _
    $region34: #{pixel_shuffle_pack_1d.1} parent=5 // pred_check_branch
      %167 = sbr.rel (%p164) target = $region36
    $region35: #{pixel_shuffle_pack_1d.1} parent=5 // pred_region
      %s168 = ssub.s32 %s10, 1
      %s169 = smul.u32 2, %s15
      %p170 = scmp.lt.s32.totalorder %s169, 3
      %s171 = scalar_select %p170, %s169, 3
      %s172 = smul.addr %s171, 8
      %s173 = scalar_lea.vmem %s0, %s172
      %p174 = pneg %p36
      %p175 = pneg %p33
      %p176 = pneg %p57
      %p177 = pneg %p54
      %p178 = pneg %p78
      %p179 = pneg %p75
      %p180 = pneg %p99
      %p181 = pneg %p96
      %p182 = pneg %p125
      %p183 = pneg %p122
      %s184 = smul.u32 2, %s15
      %p185 = scmp.lt.s32.totalorder %s184, 3
      %s186 = scalar_select %p185, %s184, 3
      %s187 = smul.addr %s186, 2
      %s188 = smul.addr %s187, 8
      %s189 = scalar_lea.vmem %s4, %s188
      %s190 = smul.u32 2, %s15
      %p191 = scmp.lt.s32.totalorder %s190, 3
      %s192 = scalar_select %p191, %s190, 3
      %s193 = smul.addr %s192, 8
      %s194 = scalar_lea.vmem %s0, %s193
      %s195 = smul.u32 2, %s15
      %s196 = smul.u32 2, %s15
      %p197 = scmp.lt.s32.totalorder %s196, 3
      %s198 = scalar_select %p197, %s196, 3
      %s199 = smul.addr %s198, 2
      %s200 = smul.addr %s199, 8
      %s201 = scalar_lea.vmem %s4, %s200
      %s202 = smul.u32 2, %s15
      %v204 = vld [vmem:[%s194] sm:$0xff]
      %v205 = vld [vmem:[%s194 + $0x8] sm:$0xff]
      %v206 = vld [vmem:[%s3] sm:$0x77]
      %207 = vrot.lane.b32.xlu0 %v204, 1
      %v208 = vpop.permute.xlu0 %207
      %209 = vrot.lane.b32.xlu0 %v205, 1
      %v210 = vpop.permute.xlu0 %209
      %v211 = vlaneseq
      %v212 = vand.u32 %v211, 127
      %vm213 = vcmp.lt.s32.totalorder %v212, 1
      %v214 = vsel %vm213, %v208, %v210
      %v215 = vsel %vm213, %v210, %v208
      %v217 = vperm.slane %v206, 0
      %v218 = vperm.slane %v206, 4
      %v221 = vperm.slane %v217, 0
      %v222 = vperm.slane %v218, 0
      %v223 = vmul.f32 %v215, %v221
      %v224 = vmul.f32 %v214, %v222
      %v225 = vpack.c.bf16 %v224, %v223
      %v226 = vperm.slane %v206, 1
      %v227 = vperm.slane %v206, 5
      %v230 = vperm.slane %v226, 1
      %v231 = vperm.slane %v227, 1
      %v232 = vmul.f32 %v204, %v230
      %v233 = vmul.f32 %v205, %v231
      %v234 = vpack.c.bf16 %v233, %v232
      %235 = vrot.lane.b32.xlu0 %v204, 127
      %v236 = vpop.permute.xlu0 %235
      %237 = vrot.lane.b32.xlu0 %v205, 127
      %v238 = vpop.permute.xlu0 %237
      %vm239 = vcmp.lt.s32.totalorder %v212, 127
      %v240 = vsel %vm239, %v236, %v238
      %v241 = vsel %vm239, %v238, %v236
      %v242 = vperm.slane %v206, 2
      %v243 = vperm.slane %v206, 6
      %v246 = vperm.slane %v242, 2
      %v247 = vperm.slane %v243, 2
      %v248 = vmul.f32 %v240, %v246
      %v249 = vmul.f32 %v241, %v247
      %v250 = vpack.c.bf16 %v249, %v248
      %v252 = vunpack.c.l.b16 %v225
      %v253 = vunpack.c.h.b16 %v225
      %v254 = vpack.c.b16 %v252, %v252
      %v255 = vpack.c.b16 %v253, %v253
      %v257 = vunpack.c.l.b16 %v234
      %v258 = vunpack.c.h.b16 %v234
      %v259 = vpack.c.b16 %v257, %v257
      %v260 = vpack.c.b16 %v258, %v258
      %v262 = vunpack.c.l.b16 %v250
      %v263 = vunpack.c.h.b16 %v250
      %v264 = vpack.c.b16 %v262, %v262
      %v265 = vpack.c.b16 %v263, %v263
      %vm266 = vcmask 1043456
      %v269 = vsel %vm266, %v254, %v259
      %v273 = vsel %vm266, %v255, %v260
      %v275 = vld [vmem:[%s1] sm:$0xf]
      %v276 = vld [vmem:[%s1 + $0x4] sm:$0xf]
      %v277 = vld [vmem:[%s2] sm:$0xff]
      %v278 = vld [vmem:[%s2 + $0x8] sm:$0xff]
      %280 = vset.pattern.permute.xlu0 0
      %281 = vperm.xlu0 %280, %v277
      %v282 = vpop.permute.xlu0 %281
      %285 = vset.pattern.permute.xlu0 0
      %286 = vperm.xlu0 %285, %v278
      %v287 = vpop.permute.xlu0 %286
      %v291 = vunpack.c.l.b16 %v275
      %v292 = vunpack.c.l.b16 %v276
      %v293 = vpack.c.b16 %v292, %v291
      %vm294 = vcmask 195584
      %v296 = vsel %vm294, %v293, 0
      %v299 = vsel %vm266, %v264, 0
      %v302 = vsel %vm266, %v265, 0
      %304 = vmatpush.bf16.msra.mxu0 0
      %305 = vmatpush.bf16.msra.mxu0 0
      %306 = vmatpush.bf16.msra.mxu0 0
      %307 = vmatpush.bf16.msra.mxu0 0
      %308 = vmatpush.bf16.msra.mxu0 0
      %309 = vmatpush.bf16.msra.mxu0 0
      %310 = vmatpush.bf16.msra.mxu0 %v299
      %311 = vmatpush.bf16.msra.mxu0 %v269
      %312 = vmatmul.bf16.gmra.mxu0 %v296
      %v313 = vpop.f32.mrf.mxu0
      %v314 = vadd.f32 %v282, %v313
      %v315 = vpop.f32.mrf.mxu0
      %v316 = vadd.f32 %v287, %v315
      %317 = vdwg.mxu0
      %318 = vmatpush.bf16.msra.mxu0 0
      %319 = vmatpush.bf16.msra.mxu0 0
      %320 = vmatpush.bf16.msra.mxu0 0
      %321 = vmatpush.bf16.msra.mxu0 0
      %322 = vmatpush.bf16.msra.mxu0 0
      %323 = vmatpush.bf16.msra.mxu0 0
      %324 = vmatpush.bf16.msra.mxu0 %v302
      %325 = vmatpush.bf16.msra.mxu0 %v273
      %326 = vmatmul.bf16.gmra.mxu0 %v296
      %v327 = vpop.f32.mrf.mxu0
      %v328 = vadd.f32 %v282, %v327
      %v329 = vpop.f32.mrf.mxu0
      %v330 = vadd.f32 %v287, %v329
      %331 = vdwg.mxu0
      %333 = vrot.lane.b32.xlu0 %v316, 32
      %v334 = vpop.permute.xlu0 %333
      %337 = vrot.lane.b32.xlu0 %v314, 32
      %v338 = vpop.permute.xlu0 %337
      %340 = vrot.lane.b32.xlu0 %v316, 64
      %v341 = vpop.permute.xlu0 %340
      %343 = vrot.lane.b32.xlu0 %v314, 64
      %v344 = vpop.permute.xlu0 %343
      %346 = vrot.lane.b32.xlu0 %v316, 96
      %v347 = vpop.permute.xlu0 %346
      %349 = vrot.lane.b32.xlu0 %v314, 96
      %v350 = vpop.permute.xlu0 %349
      %vm352 = vcmask 261120
      %v353 = vsel %vm352, %v314, %v334
      %vm354 = vcmask 523264
      %v355 = vsel %vm354, %v353, %v338
      %vm356 = vcmask 785408
      %v357 = vsel %vm356, %v355, %v341
      %v358 = vsel %vm352, %v344, %v347
      %v359 = vsel %vm354, %v358, %v350
      %v360 = vsel %vm356, %v359, %v316
      %362 = vrot.lane.b32.xlu0 %v330, 32
      %v363 = vpop.permute.xlu0 %362
      %366 = vrot.lane.b32.xlu0 %v328, 32
      %v367 = vpop.permute.xlu0 %366
      %369 = vrot.lane.b32.xlu0 %v330, 64
      %v370 = vpop.permute.xlu0 %369
      %372 = vrot.lane.b32.xlu0 %v328, 64
      %v373 = vpop.permute.xlu0 %372
      %375 = vrot.lane.b32.xlu0 %v330, 96
      %v376 = vpop.permute.xlu0 %375
      %378 = vrot.lane.b32.xlu0 %v328, 96
      %v379 = vpop.permute.xlu0 %378
      %v381 = vsel %vm352, %v328, %v363
      %v382 = vsel %vm354, %v381, %v367
      %v383 = vsel %vm356, %v382, %v370
      %v384 = vsel %vm352, %v373, %v376
      %v385 = vsel %vm354, %v384, %v379
      %v386 = vsel %vm356, %v385, %v330
      %387 = vst [vmem:[%s201] sm:$0xff] %v357
      %388 = vst [vmem:[%s201 + $0x8] sm:$0xff] %v360
      %389 = vst [vmem:[%s201 + $0x10] sm:$0xff] %v383
      %390 = vst [vmem:[%s201 + $0x18] sm:$0xff] %v386
      %s391 = smul.u32 2, %s15
      %p392 = scmp.lt.s32.totalorder %s391, 3
      %s393 = scalar_select %p392, %s391, 3
      %s394 = smul.addr %s393, 2
      %s395 = smul.addr %s394, 8
      %s396 = scalar_lea.vmem %s4, %s395
      // Predicated region
      $region37: #{pixel_shuffle_pack_1d.1} parent=35 // pred_check
        %p397 = pneg %p122
      $region38: #{pixel_shuffle_pack_1d.1} parent=35 // pred_check_branch
        %399 = sbr.rel (%p397) target = $region40
      $region39: #{pixel_shuffle_pack_1d.1} parent=35 // pred_region
        %s400 = smul.u32 2, %s15
      $region40: #{pixel_shuffle_pack_1d.1} parent=35 // pred_fallthru
        _
    $region36: #{pixel_shuffle_pack_1d.1} parent=5 // pred_fallthru
      _
    %p401 = scmp.le.s32.totalorder 2, %s10
    // Predicated region
    $region41: #{pixel_shuffle_pack_1d.1} parent=5 // pred_check
      %p402 = pneg %p401
    $region42: #{pixel_shuffle_pack_1d.1} parent=5 // pred_check_branch
      %404 = sbr.rel (%p402) target = $region44
    $region43: #{pixel_shuffle_pack_1d.1} parent=5 // pred_region
      %s405 = ssub.s32 %s10, 2
      // Predicated region
      $region45: #{pixel_shuffle_pack_1d.1} parent=43 // pred_check
        %p406 = pneg %p128
      $region46: #{pixel_shuffle_pack_1d.1} parent=43 // pred_check_branch
        %408 = sbr.rel (%p406) target = $region48
      $region47: #{pixel_shuffle_pack_1d.1} parent=43 // pred_region
        %s409 = smul.u32 2, %s16
        %p410 = scmp.lt.s32.totalorder %s409, 3
        %s411 = scalar_select %p410, %s409, 3
        %s412 = smul.addr %s411, 2
        %s413 = smul.addr %s412, 8
        %s414 = scalar_lea.vmem %s4, %s413
      $region48: #{pixel_shuffle_pack_1d.1} parent=43 // pred_fallthru
        _
    $region44: #{pixel_shuffle_pack_1d.1} parent=5 // pred_fallthru
      _
  $region6: #{pixel_shuffle_pack_1d.1} parent=0 // loop_footer
    %s14 = sadd.s32 1, %s10
  $region7: #{pixel_shuffle_pack_1d.1} parent=0 // loop_footer_branch
    %9 = sbr.rel target = $region3
  $region8: #{pixel_shuffle_pack_1d.1} parent=0 // loop_exit
    _

</llo_original>
